<compile_context>
chip_gen: v5e
topology: v5e:2x2
jax: 0.10.0
libtpu: 0.0.40
codegen_flags: <defaults>
</compile_context>

<pallas_src>
import functools

import jax
import jax.numpy as jnp
from jax.experimental import pallas as pl
from jax.experimental.pallas import tpu as pltpu

LANE = 128            # pad every feature dim to one full lane width
BIAS_ROWS = 8         # bias lives in a sublane-aligned 8-row block after W
MAX_BATCH_TILE = 512  # rows per grid step (fits easily in VMEM on all chips)


def _round_up(n, m):
    return ((n + m - 1) // m) * m


def mlp_kernel(x_ref, p_ref, o_ref, *, num_layers):
    """x_ref: (TB,128) activation tile (zero-padded past state_n)
    p_ref: (L,136,128) packed params; rows 0..127 = W_l (zero-padded),
           row 128 = b_l, rows 129..135 = 0.  Resident across the grid.
    o_ref: (TB,128) lane-dense output tile (cols >= action_n are zero)."""
    h = x_ref[...]
    for l in range(num_layers):                  # static unroll, 4 layers
        w = p_ref[l, :LANE, :]                   # (128,128)
        b = p_ref[l, LANE:LANE + 1, :]           # (1,128)
        h = jnp.dot(h, w, preferred_element_type=jnp.float32) + b
        if l < num_layers - 1:
            h = jnp.maximum(h, 0.0)
    o_ref[...] = h.astype(o_ref.dtype)


def pack_params(params):
    """Pack ((w,b),...) with w:(in,out), b:(1,out) into one (L,136,128) buffer."""
    num_layers = len(params)
    packed = jnp.zeros((num_layers, LANE + BIAS_ROWS, LANE), jnp.float32)
    for l, (w, b) in enumerate(params):
        fan_in, fan_out = w.shape
        assert fan_in <= LANE and fan_out <= LANE, "feature dims must be <= 128"
        packed = packed.at[l, :fan_in, :fan_out].set(w.astype(jnp.float32))
        packed = packed.at[l, LANE, :fan_out].set(
            b.reshape(-1).astype(jnp.float32))
    return packed


def mlp_forward(x, params):
    """params = ((w1,b1),...,(w4,b4)); wi:(in,out), bi:(1,out).
    Returns (batch, action_n) float32, identical to the PyTorch Mlp forward."""
    num_layers = len(params)
    batch, state_n = x.shape
    action_n = params[-1][0].shape[1]

    packed = pack_params(params)

    # Batch tiling: pad batch to a multiple of the tile so every block is full.
    tb = min(MAX_BATCH_TILE, _round_up(batch, 8))
    batch_p = _round_up(batch, tb)
    x_p = jnp.zeros((batch_p, LANE), jnp.float32).at[:batch, :state_n].set(
        x.astype(jnp.float32))

    grid = (batch_p // tb,)
    kernel = functools.partial(mlp_kernel, num_layers=num_layers)

    out_p = pl.pallas_call(
        kernel,
        out_shape=jax.ShapeDtypeStruct((batch_p, LANE), jnp.float32),
        grid=grid,
        in_specs=[
            # Batch tile, pipelined over the grid.
            pl.BlockSpec((tb, LANE), lambda i: (i, 0)),
            # Packed params: constant index_map -> DMA'd once, stays resident.
            pl.BlockSpec((num_layers, LANE + BIAS_ROWS, LANE),
                         lambda i: (0, 0, 0)),
        ],
        out_specs=pl.BlockSpec((tb, LANE), lambda i: (i, 0)),
        compiler_params=pltpu.CompilerParams(
            dimension_semantics=("parallel",),   # shard batch tiles across TCs
            vmem_limit_bytes=32 * 1024 * 1024,
        ),
    )(x_p, packed)

    return out_p[:batch, :action_n]


def init_linear(key, fan_in, fan_out):
    """Deterministic PyTorch-style init; (in,out) layout (transposed vs torch)."""
    kw, kb = jax.random.split(key)
    bound = 1.0 / jnp.sqrt(fan_in)
    w = jax.random.uniform(kw, (fan_in, fan_out), jnp.float32, -bound, bound)
    b = jax.random.uniform(kb, (1, fan_out), jnp.float32, -bound, bound)
    return w, b


if __name__ == "__main__":
    # LunarLander-v2: state_n = 8, action_n = 4; small hidden size.
    state_n, action_n, mid_n = 8, 4, 32
    batch = 8

    key = jax.random.PRNGKey(0)
    k_x, k1, k2, k3, k4 = jax.random.split(key, 5)

    params = (
        init_linear(k1, state_n, mid_n),
        init_linear(k2, mid_n, mid_n),
        init_linear(k3, mid_n, mid_n),
        init_linear(k4, mid_n, action_n),
    )

    x = jax.random.normal(k_x, (batch, state_n), jnp.float32)

    out = mlp_forward(x, params)
    out = jax.block_until_ready(out)

    # Pure-JAX reference (same math, outside Pallas).
    def ref(x, params):
        h = x
        for i, (w, b) in enumerate(params):
            h = h @ w + b
            if i < len(params) - 1:
                h = jnp.maximum(h, 0.0)
        return h

    expected = ref(x, params)
    assert out.shape == (batch, action_n)
    assert jnp.allclose(out, expected, atol=1e-4, rtol=1e-4)

    print("KERNEL_OK")
</pallas_src>

<mosaic_0001>
module attributes {stable_mosaic.version = 11 : i64} {
  func.func @mlp_kernel(%arg0: i32, %arg1: memref<8x128xf32, #tpu.memory_space<vmem>>, %arg2: memref<4x136x128xf32, #tpu.memory_space<vmem>>, %arg3: memref<8x128xf32, #tpu.memory_space<vmem>>) attributes {dimension_semantics = [#tpu.dimension_semantics<parallel>], iteration_bounds = array<i64: 1>, scalar_prefetch = 0 : i64, scratch_operands = 0 : i64, tpu.core_type = #tpu.core_type<tc>, window_params = [{transform_indices = @transform_0, window_bounds = array<i64: 8, 128>}, {pipeline_mode = #tpu.pipeline_mode<synchronous>, transform_indices = @transform_1, window_bounds = array<i64: 4, 136, 128>}, {transform_indices = @transform_2, window_bounds = array<i64: 8, 128>}]} {
    %c0 = arith.constant 0 : index
    %c0_0 = arith.constant 0 : index
    %0 = vector.load %arg1[%c0, %c0_0] : memref<8x128xf32, #tpu.memory_space<vmem>>, vector<8x128xf32>
    %c0_1 = arith.constant 0 : index
    %c0_2 = arith.constant 0 : index
    %c0_3 = arith.constant 0 : index
    %1 = vector.load %arg2[%c0_1, %c0_2, %c0_3] : memref<4x136x128xf32, #tpu.memory_space<vmem>>, vector<1x128x128xf32>
    %2 = vector.shape_cast %1 : vector<1x128x128xf32> to vector<128x128xf32>
    %c0_4 = arith.constant 0 : index
    %c128 = arith.constant 128 : index
    %c0_5 = arith.constant 0 : index
    %3 = vector.load %arg2[%c0_4, %c128, %c0_5] : memref<4x136x128xf32, #tpu.memory_space<vmem>>, vector<1x1x128xf32>
    %4 = vector.shape_cast %3 : vector<1x1x128xf32> to vector<1x128xf32>
    %cst = arith.constant dense<0.000000e+00> : vector<8x128xf32>
    %5 = tpu.matmul %0, %2, %cst {dimension_numbers = #tpu.dot_dimension_numbers<[1], [0], [0], [1], [0, 0, 1, 1], [], []>} : vector<8x128xf32>, vector<128x128xf32>, vector<8x128xf32> -> vector<8x128xf32>
    %6 = vector.broadcast %4 : vector<1x128xf32> to vector<8x128xf32>
    %7 = arith.addf %5, %6 : vector<8x128xf32>
    %cst_6 = arith.constant 0.000000e+00 : f32
    %8 = vector.broadcast %cst_6 : f32 to vector<8x128xf32>
    %9 = arith.maximumf %7, %8 : vector<8x128xf32>
    %c1 = arith.constant 1 : index
    %c0_7 = arith.constant 0 : index
    %c0_8 = arith.constant 0 : index
    %10 = vector.load %arg2[%c1, %c0_7, %c0_8] : memref<4x136x128xf32, #tpu.memory_space<vmem>>, vector<1x128x128xf32>
    %11 = vector.shape_cast %10 : vector<1x128x128xf32> to vector<128x128xf32>
    %c1_9 = arith.constant 1 : index
    %c128_10 = arith.constant 128 : index
    %c0_11 = arith.constant 0 : index
    %12 = vector.load %arg2[%c1_9, %c128_10, %c0_11] : memref<4x136x128xf32, #tpu.memory_space<vmem>>, vector<1x1x128xf32>
    %13 = vector.shape_cast %12 : vector<1x1x128xf32> to vector<1x128xf32>
    %cst_12 = arith.constant dense<0.000000e+00> : vector<8x128xf32>
    %14 = tpu.matmul %9, %11, %cst_12 {dimension_numbers = #tpu.dot_dimension_numbers<[1], [0], [0], [1], [0, 0, 1, 1], [], []>} : vector<8x128xf32>, vector<128x128xf32>, vector<8x128xf32> -> vector<8x128xf32>
    %15 = vector.broadcast %13 : vector<1x128xf32> to vector<8x128xf32>
    %16 = arith.addf %14, %15 : vector<8x128xf32>
    %cst_13 = arith.constant 0.000000e+00 : f32
    %17 = vector.broadcast %cst_13 : f32 to vector<8x128xf32>
    %18 = arith.maximumf %16, %17 : vector<8x128xf32>
    %c2 = arith.constant 2 : index
    %c0_14 = arith.constant 0 : index
    %c0_15 = arith.constant 0 : index
    %19 = vector.load %arg2[%c2, %c0_14, %c0_15] : memref<4x136x128xf32, #tpu.memory_space<vmem>>, vector<1x128x128xf32>
    %20 = vector.shape_cast %19 : vector<1x128x128xf32> to vector<128x128xf32>
    %c2_16 = arith.constant 2 : index
    %c128_17 = arith.constant 128 : index
    %c0_18 = arith.constant 0 : index
    %21 = vector.load %arg2[%c2_16, %c128_17, %c0_18] : memref<4x136x128xf32, #tpu.memory_space<vmem>>, vector<1x1x128xf32>
    %22 = vector.shape_cast %21 : vector<1x1x128xf32> to vector<1x128xf32>
    %cst_19 = arith.constant dense<0.000000e+00> : vector<8x128xf32>
    %23 = tpu.matmul %18, %20, %cst_19 {dimension_numbers = #tpu.dot_dimension_numbers<[1], [0], [0], [1], [0, 0, 1, 1], [], []>} : vector<8x128xf32>, vector<128x128xf32>, vector<8x128xf32> -> vector<8x128xf32>
    %24 = vector.broadcast %22 : vector<1x128xf32> to vector<8x128xf32>
    %25 = arith.addf %23, %24 : vector<8x128xf32>
    %cst_20 = arith.constant 0.000000e+00 : f32
    %26 = vector.broadcast %cst_20 : f32 to vector<8x128xf32>
    %27 = arith.maximumf %25, %26 : vector<8x128xf32>
    %c3 = arith.constant 3 : index
    %c0_21 = arith.constant 0 : index
    %c0_22 = arith.constant 0 : index
    %28 = vector.load %arg2[%c3, %c0_21, %c0_22] : memref<4x136x128xf32, #tpu.memory_space<vmem>>, vector<1x128x128xf32>
    %29 = vector.shape_cast %28 : vector<1x128x128xf32> to vector<128x128xf32>
    %c3_23 = arith.constant 3 : index
    %c128_24 = arith.constant 128 : index
    %c0_25 = arith.constant 0 : index
    %30 = vector.load %arg2[%c3_23, %c128_24, %c0_25] : memref<4x136x128xf32, #tpu.memory_space<vmem>>, vector<1x1x128xf32>
    %31 = vector.shape_cast %30 : vector<1x1x128xf32> to vector<1x128xf32>
    %cst_26 = arith.constant dense<0.000000e+00> : vector<8x128xf32>
    %32 = tpu.matmul %27, %29, %cst_26 {dimension_numbers = #tpu.dot_dimension_numbers<[1], [0], [0], [1], [0, 0, 1, 1], [], []>} : vector<8x128xf32>, vector<128x128xf32>, vector<8x128xf32> -> vector<8x128xf32>
    %33 = vector.broadcast %31 : vector<1x128xf32> to vector<8x128xf32>
    %34 = arith.addf %32, %33 : vector<8x128xf32>
    %c0_27 = arith.constant 0 : index
    %c0_28 = arith.constant 0 : index
    %35 = vector.load %arg3[%c0_27, %c0_28] : memref<8x128xf32, #tpu.memory_space<vmem>>, vector<8x128xf32>
    tpu.vector_store %arg3[%c0_27, %c0_28], %34 {strides = array<i32>} : memref<8x128xf32, #tpu.memory_space<vmem>>, vector<8x128xf32>,
    return
  }
  func.func @transform_0(%arg0: i32) -> (i32, i32) {
    %c0_i32 = arith.constant 0 : i32
    %c0_i32_0 = arith.constant 0 : i32
    return %arg0, %c0_i32 : i32, i32
  }
  func.func @transform_1(%arg0: i32) -> (i32, i32, i32) {
    %c0_i32 = arith.constant 0 : i32
    %c0_i32_0 = arith.constant 0 : i32
    %c0_i32_1 = arith.constant 0 : i32
    %c0_i32_2 = arith.constant 0 : i32
    return %c0_i32, %c0_i32_0, %c0_i32_1 : i32, i32, i32
  }
  func.func @transform_2(%arg0: i32) -> (i32, i32) {
    %c0_i32 = arith.constant 0 : i32
    %c0_i32_0 = arith.constant 0 : i32
    return %arg0, %c0_i32 : i32, i32
  }
}

</mosaic_0001>

<llo_original>
// kernel: tpu_custom_call.1
$region0: #{tpu_custom_call.1}
  #allocation0 [shape = 'u32[]', space=smem, size = 0x4, offset = 0x4, fixed_abs, tag = 'smem constant byte address 0x4 - core index']
  #allocation1 [shape = 'u32[72,128]{1,0:T(1,128)}', space=vmem, size = 0x9000, scoped, tag = 'internal scratch']
  %s0 = inlined_call_operand.hbm [shape: f32[8,128], index: 0, kind: input, shape index: {}]
  %s1 = inlined_call_operand.hbm [shape: f32[4,136,128], index: 1, kind: input, shape index: {}]
  %s2 = inlined_call_operand.hbm [shape: f32[8,128], index: 2, kind: output, shape index: {}]
  %s3 = sld [smem:[#allocation0]]
  $region26: #{tpu_custom_call.1} parent=0
    _
  %s5 = ssub.s32 1, %s3
  %s6 = scalar_select 0, %s5, %s3
  $region1: #{tpu_custom_call.1} parent=0
    #allocation2 [shape = 'u8[4096]{0}', space=vmem, size = 0x1000, scoped, tag = 'input window, operand 0, single buffered']
    #allocation3 [shape = 's32[1]{0}', space=sflag, size = 0x4, scoped, tag = 'scoped memory for tpu_custom_call.1']
    #allocation4 [shape = 's32[1]{0}', space=sflag, size = 0x4, scoped, tag = 'scoped memory for tpu_custom_call.1']
    #allocation5 [shape = 'u8[278528]{0}', space=vmem, size = 0x44000, scoped, tag = 'input window, operand 1, single buffered']
    #allocation6 [shape = 's32[1]{0}', space=sflag, size = 0x4, scoped, tag = 'scoped memory for tpu_custom_call.1']
    #allocation7 [shape = 'u8[4096]{0}', space=vmem, size = 0x1000, scoped, tag = 'output window, operand 0, single buffered']
    %7 = vsyncpa [#allocation3], 0
    %8 = vsyncpa [#allocation6], 0
    %9 = vsyncpa [#allocation4], 0
    // Predicated region
    $region2: #{tpu_custom_call.1} parent=1 // pred_check
      _
    $region3: #{tpu_custom_call.1} parent=1 // pred_check_branch
      %11 = sbr.rel (0) target = $region5
    $region4: #{tpu_custom_call.1} parent=1 // pred_region
      %13 = vsyncadd [#allocation3], 0
      %s15 = sshll.u32 %s0, 4
      %s16 = int_to_ptr.hbm [resolvable:$true] %s15
      %s17 = sshll.u32 [#allocation2], 4
      %s18 = int_to_ptr.vmem [resolvable:$true] %s17
      %20 = dma.hbm_to_vmem [thread:$0]  %s16, 128, %s18, [#allocation3]
    $region5: #{tpu_custom_call.1} parent=1 // pred_fallthru
      _
    // Predicated region
    $region6: #{tpu_custom_call.1} parent=1 // pred_check
      _
    $region7: #{tpu_custom_call.1} parent=1 // pred_check_branch
      %22 = sbr.rel (0) target = $region9
    $region8: #{tpu_custom_call.1} parent=1 // pred_region
      %24 = vsyncadd [#allocation6], 0
      %s25 = sshll.u32 %s1, 4
      %s26 = int_to_ptr.hbm [resolvable:$true] %s25
      %s27 = sshll.u32 [#allocation5], 4
      %s28 = int_to_ptr.vmem [resolvable:$true] %s27
      %33 = dma.hbm_to_vmem [thread:$0]  %s26, 8704, %s28, [#allocation6], 128, 128, 8
    $region9: #{tpu_custom_call.1} parent=1 // pred_fallthru
      _
    // Predicated region
    $region10: #{tpu_custom_call.1} parent=1 // pred_check
      _
    $region11: #{tpu_custom_call.1} parent=1 // pred_check_branch
      %35 = sbr.rel (0) target = $region13
    $region12: #{tpu_custom_call.1} parent=1 // pred_region
      %37 = dma.done [#allocation3], 128
    $region13: #{tpu_custom_call.1} parent=1 // pred_fallthru
      _
    // Predicated region
    $region14: #{tpu_custom_call.1} parent=1 // pred_check
      _
    $region15: #{tpu_custom_call.1} parent=1 // pred_check_branch
      %39 = sbr.rel (0) target = $region17
    $region16: #{tpu_custom_call.1} parent=1 // pred_region
      %41 = dma.done [#allocation6], 8704
    $region17: #{tpu_custom_call.1} parent=1 // pred_fallthru
      _
    %v42 = vld [vmem:[#allocation2] sm:$0xff]
    %v43 = vld [vmem:[#allocation5] sm:$0xff]
    %v44 = vld [vmem:[#allocation5 + $0x8] sm:$0xff]
    %v45 = vld [vmem:[#allocation5 + $0x10] sm:$0xff]
    %v46 = vld [vmem:[#allocation5 + $0x18] sm:$0xff]
    %v47 = vld [vmem:[#allocation5 + $0x20] sm:$0xff]
    %v48 = vld [vmem:[#allocation5 + $0x28] sm:$0xff]
    %v49 = vld [vmem:[#allocation5 + $0x30] sm:$0xff]
    %v50 = vld [vmem:[#allocation5 + $0x38] sm:$0xff]
    %v51 = vld [vmem:[#allocation5 + $0x40] sm:$0xff]
    %v52 = vld [vmem:[#allocation5 + $0x48] sm:$0xff]
    %v53 = vld [vmem:[#allocation5 + $0x50] sm:$0xff]
    %v54 = vld [vmem:[#allocation5 + $0x58] sm:$0xff]
    %v55 = vld [vmem:[#allocation5 + $0x60] sm:$0xff]
    %v56 = vld [vmem:[#allocation5 + $0x68] sm:$0xff]
    %v57 = vld [vmem:[#allocation5 + $0x70] sm:$0xff]
    %v58 = vld [vmem:[#allocation5 + $0x78] sm:$0xff]
    %v59 = vld [vmem:[#allocation5 + $0x80] sm:$0x1]
    %v60 = vperm.slane %v59, 0
    %61 = vmatpush.msra.mxu0 %v58
    %62 = vmatpush.msra.mxu0 %v57
    %63 = vmatpush.msra.mxu0 %v56
    %64 = vmatpush.msra.mxu0 %v55
    %65 = vmatpush.msra.mxu0 %v54
    %66 = vmatpush.msra.mxu0 %v53
    %67 = vmatpush.msra.mxu0 %v52
    %68 = vmatpush.msra.mxu0 %v51
    %69 = vmatpush.msra.mxu0 %v50
    %70 = vmatpush.msra.mxu0 %v49
    %71 = vmatpush.msra.mxu0 %v48
    %72 = vmatpush.msra.mxu0 %v47
    %73 = vmatpush.msra.mxu0 %v46
    %74 = vmatpush.msra.mxu0 %v45
    %75 = vmatpush.msra.mxu0 %v44
    %76 = vmatpush.msra.mxu0 %v43
    %77 = vmatmul.f32.gmra.mxu0 %v42
    %v78 = vpop.f32.mrf.mxu0
    %v79 = vadd.f32 %v60, %v78
    %80 = vdwg.mxu0
    %v81 = vmax.f32 %v79, 0.0
    %s82 = scalar_lea.vmem [#allocation5], 136
    %v83 = vld [vmem:[%s82] sm:$0xff]
    %v84 = vld [vmem:[%s82 + $0x8] sm:$0xff]
    %v85 = vld [vmem:[%s82 + $0x10] sm:$0xff]
    %v86 = vld [vmem:[%s82 + $0x18] sm:$0xff]
    %v87 = vld [vmem:[%s82 + $0x20] sm:$0xff]
    %v88 = vld [vmem:[%s82 + $0x28] sm:$0xff]
    %v89 = vld [vmem:[%s82 + $0x30] sm:$0xff]
    %v90 = vld [vmem:[%s82 + $0x38] sm:$0xff]
    %v91 = vld [vmem:[%s82 + $0x40] sm:$0xff]
    %v92 = vld [vmem:[%s82 + $0x48] sm:$0xff]
    %v93 = vld [vmem:[%s82 + $0x50] sm:$0xff]
    %v94 = vld [vmem:[%s82 + $0x58] sm:$0xff]
    %v95 = vld [vmem:[%s82 + $0x60] sm:$0xff]
    %v96 = vld [vmem:[%s82 + $0x68] sm:$0xff]
    %v97 = vld [vmem:[%s82 + $0x70] sm:$0xff]
    %v98 = vld [vmem:[%s82 + $0x78] sm:$0xff]
    %v99 = vld [vmem:[%s82 + $0x80] sm:$0x1]
    %v100 = vperm.slane %v99, 0
    %101 = vmatpush.msra.mxu0 %v98
    %102 = vmatpush.msra.mxu0 %v97
    %103 = vmatpush.msra.mxu0 %v96
    %104 = vmatpush.msra.mxu0 %v95
    %105 = vmatpush.msra.mxu0 %v94
    %106 = vmatpush.msra.mxu0 %v93
    %107 = vmatpush.msra.mxu0 %v92
    %108 = vmatpush.msra.mxu0 %v91
    %109 = vmatpush.msra.mxu0 %v90
    %110 = vmatpush.msra.mxu0 %v89
    %111 = vmatpush.msra.mxu0 %v88
    %112 = vmatpush.msra.mxu0 %v87
    %113 = vmatpush.msra.mxu0 %v86
    %114 = vmatpush.msra.mxu0 %v85
    %115 = vmatpush.msra.mxu0 %v84
    %116 = vmatpush.msra.mxu0 %v83
    %117 = vmatmul.f32.gmra.mxu0 %v81
    %v118 = vpop.f32.mrf.mxu0
    %v119 = vadd.f32 %v100, %v118
    %120 = vdwg.mxu0
    %v121 = vmax.f32 %v119, 0.0
    %s122 = scalar_lea.vmem [#allocation5], 272
    %v123 = vld [vmem:[%s122] sm:$0xff]
    %v124 = vld [vmem:[%s122 + $0x8] sm:$0xff]
    %v125 = vld [vmem:[%s122 + $0x10] sm:$0xff]
    %v126 = vld [vmem:[%s122 + $0x18] sm:$0xff]
    %v127 = vld [vmem:[%s122 + $0x20] sm:$0xff]
    %v128 = vld [vmem:[%s122 + $0x28] sm:$0xff]
    %v129 = vld [vmem:[%s122 + $0x30] sm:$0xff]
    %v130 = vld [vmem:[%s122 + $0x38] sm:$0xff]
    %v131 = vld [vmem:[%s122 + $0x40] sm:$0xff]
    %v132 = vld [vmem:[%s122 + $0x48] sm:$0xff]
    %v133 = vld [vmem:[%s122 + $0x50] sm:$0xff]
    %v134 = vld [vmem:[%s122 + $0x58] sm:$0xff]
    %v135 = vld [vmem:[%s122 + $0x60] sm:$0xff]
    %v136 = vld [vmem:[%s122 + $0x68] sm:$0xff]
    %v137 = vld [vmem:[%s122 + $0x70] sm:$0xff]
    %v138 = vld [vmem:[%s122 + $0x78] sm:$0xff]
    %v139 = vld [vmem:[%s122 + $0x80] sm:$0x1]
    %v140 = vperm.slane %v139, 0
    %141 = vmatpush.msra.mxu0 %v138
    %142 = vmatpush.msra.mxu0 %v137
    %143 = vmatpush.msra.mxu0 %v136
    %144 = vmatpush.msra.mxu0 %v135
    %145 = vmatpush.msra.mxu0 %v134
    %146 = vmatpush.msra.mxu0 %v133
    %147 = vmatpush.msra.mxu0 %v132
    %148 = vmatpush.msra.mxu0 %v131
    %149 = vmatpush.msra.mxu0 %v130
    %150 = vmatpush.msra.mxu0 %v129
    %151 = vmatpush.msra.mxu0 %v128
    %152 = vmatpush.msra.mxu0 %v127
    %153 = vmatpush.msra.mxu0 %v126
    %154 = vmatpush.msra.mxu0 %v125
    %155 = vmatpush.msra.mxu0 %v124
    %156 = vmatpush.msra.mxu0 %v123
    %157 = vmatmul.f32.gmra.mxu0 %v121
    %v158 = vpop.f32.mrf.mxu0
    %v159 = vadd.f32 %v140, %v158
    %160 = vdwg.mxu0
    %v161 = vmax.f32 %v159, 0.0
    %s162 = scalar_lea.vmem [#allocation5], 408
    %v163 = vld [vmem:[%s162] sm:$0xff]
    %v164 = vld [vmem:[%s162 + $0x8] sm:$0xff]
    %v165 = vld [vmem:[%s162 + $0x10] sm:$0xff]
    %v166 = vld [vmem:[%s162 + $0x18] sm:$0xff]
    %v167 = vld [vmem:[%s162 + $0x20] sm:$0xff]
    %v168 = vld [vmem:[%s162 + $0x28] sm:$0xff]
    %v169 = vld [vmem:[%s162 + $0x30] sm:$0xff]
    %v170 = vld [vmem:[%s162 + $0x38] sm:$0xff]
    %v171 = vld [vmem:[%s162 + $0x40] sm:$0xff]
    %v172 = vld [vmem:[%s162 + $0x48] sm:$0xff]
    %v173 = vld [vmem:[%s162 + $0x50] sm:$0xff]
    %v174 = vld [vmem:[%s162 + $0x58] sm:$0xff]
    %v175 = vld [vmem:[%s162 + $0x60] sm:$0xff]
    %v176 = vld [vmem:[%s162 + $0x68] sm:$0xff]
    %v177 = vld [vmem:[%s162 + $0x70] sm:$0xff]
    %v178 = vld [vmem:[%s162 + $0x78] sm:$0xff]
    %v179 = vld [vmem:[%s162 + $0x80] sm:$0x1]
    %v180 = vperm.slane %v179, 0
    %181 = vmatpush.msra.mxu0 %v178
    %182 = vmatpush.msra.mxu0 %v177
    %183 = vmatpush.msra.mxu0 %v176
    %184 = vmatpush.msra.mxu0 %v175
    %185 = vmatpush.msra.mxu0 %v174
    %186 = vmatpush.msra.mxu0 %v173
    %187 = vmatpush.msra.mxu0 %v172
    %188 = vmatpush.msra.mxu0 %v171
    %189 = vmatpush.msra.mxu0 %v170
    %190 = vmatpush.msra.mxu0 %v169
    %191 = vmatpush.msra.mxu0 %v168
    %192 = vmatpush.msra.mxu0 %v167
    %193 = vmatpush.msra.mxu0 %v166
    %194 = vmatpush.msra.mxu0 %v165
    %195 = vmatpush.msra.mxu0 %v164
    %196 = vmatpush.msra.mxu0 %v163
    %197 = vmatmul.f32.gmra.mxu0 %v161
    %v198 = vpop.f32.mrf.mxu0
    %v199 = vadd.f32 %v180, %v198
    %200 = vdwg.mxu0
    %201 = vst [vmem:[#allocation7] sm:$0xff] %v199
    // Predicated region
    $region18: #{tpu_custom_call.1} parent=1 // pred_check
      _
    $region19: #{tpu_custom_call.1} parent=1 // pred_check_branch
      %203 = sbr.rel (0) target = $region21
    $region20: #{tpu_custom_call.1} parent=1 // pred_region
      %205 = vsyncadd [#allocation4], 0
      %s207 = sshll.u32 [#allocation7], 4
      %s208 = int_to_ptr.vmem [resolvable:$true] %s207
      %s209 = sshll.u32 %s2, 4
      %s210 = int_to_ptr.hbm [resolvable:$true] %s209
      %212 = dma.vmem_to_hbm [thread:$0]  %s208, 128, %s210, [#allocation4]
    $region21: #{tpu_custom_call.1} parent=1 // pred_fallthru
      _
    // Predicated region
    $region22: #{tpu_custom_call.1} parent=1 // pred_check
      _
    $region23: #{tpu_custom_call.1} parent=1 // pred_check_branch
      %214 = sbr.rel (0) target = $region25
    $region24: #{tpu_custom_call.1} parent=1 // pred_region
      %216 = dma.done [#allocation4], 128
    $region25: #{tpu_custom_call.1} parent=1 // pred_fallthru
      _
    %217 = vsyncpa [#allocation3], 1
    %218 = vsyncpa [#allocation6], 1
    %219 = vsyncpa [#allocation4], 1

</llo_original>
